<compile_context>
chip_gen: v6e
topology: v6e:2x2x1
jax: 0.10.0
libtpu: 0.0.40
codegen_flags: <defaults>
</compile_context>

<pallas_src>
import jax
import jax.numpy as jnp
from jax.experimental import pallas as pl
from jax.experimental.pallas import tpu as pltpu


N_TRACK = 10
N_WAYPOINTS = 3
HIDDEN = 128
NUM_LAYERS = 3
HALF_IN = N_TRACK * 2           # 20 (per-side flattened features)
IN_DIM = 2 * HALF_IN            # 40
OUT_DIM = N_WAYPOINTS * 2       # 6
OUT_PAD = 8                     # narrow output pad (full-array last dim)
BN_EPS = 1e-5
MAX_TILE_B = 4096               # amortizes per-step overhead; fits all gens
MIN_TILE_B = 8                  # sublane alignment


def _round_up(x, m):
    return ((x + m - 1) // m) * m


def mlp_planner_kernel(
    xl_ref, xr_ref,
    w1l_ref, w1r_ref, b1_ref,
    w2_ref, b2_ref,
    w3_ref, b3_ref,
    w4_ref, b4_ref,
    out_ref,
):
    # Layer 1: x @ W1 == left @ W1[:20] + right @ W1[20:]  (BN folded into W/b).
    # Inputs already bf16; accumulate in f32 on the MXU.
    h = jnp.dot(xl_ref[...], w1l_ref[...], preferred_element_type=jnp.float32)
    h = h + jnp.dot(xr_ref[...], w1r_ref[...],
                    preferred_element_type=jnp.float32)
    h = jnp.maximum(h + b1_ref[...], 0.0)            # ReLU (Dropout = identity)

    h = jnp.dot(h.astype(jnp.bfloat16), w2_ref[...],
                preferred_element_type=jnp.float32)
    h = jnp.maximum(h + b2_ref[...], 0.0)

    h = jnp.dot(h.astype(jnp.bfloat16), w3_ref[...],
                preferred_element_type=jnp.float32)
    h = jnp.maximum(h + b3_ref[...], 0.0)

    out = jnp.dot(h.astype(jnp.bfloat16), w4_ref[...],
                  preferred_element_type=jnp.float32)
    out_ref[...] = out + b4_ref[...]                  # (tile_b, 8) f32 writeback


def init_params(key):
    """Deterministic parameter init matching the shapes of MLPPlanner.__init__."""
    ks = jax.random.split(key, 16)
    params = {}
    dims = [IN_DIM] + [HIDDEN] * NUM_LAYERS + [OUT_DIM]
    idx = 0
    for li in range(NUM_LAYERS + 1):
        fan_in, fan_out = dims[li], dims[li + 1]
        bound = 1.0 / jnp.sqrt(fan_in)
        params[f"w{li+1}"] = jax.random.uniform(
            ks[idx], (fan_in, fan_out), jnp.float32, -bound, bound)
        params[f"b{li+1}"] = jax.random.uniform(
            ks[idx + 1], (1, fan_out), jnp.float32, -bound, bound)
        idx += 2
    # BatchNorm params for the 3 hidden layers (gamma, beta, running mean/var).
    for li in range(NUM_LAYERS):
        kg, kb, km, kv = jax.random.split(ks[idx], 4)
        idx += 1
        gamma = 1.0 + 0.1 * jax.random.normal(kg, (1, HIDDEN), jnp.float32)
        beta = 0.1 * jax.random.normal(kb, (1, HIDDEN), jnp.float32)
        rmean = 0.1 * jax.random.normal(km, (1, HIDDEN), jnp.float32)
        rvar = 1.0 + 0.1 * jax.random.uniform(kv, (1, HIDDEN), jnp.float32)
        scale = gamma / jnp.sqrt(rvar + BN_EPS)       # BN (eval) as affine
        shift = beta - rmean * scale
        params[f"s{li+1}"] = scale
        params[f"t{li+1}"] = shift
    return params


def fold_params(params):
    """Fold BN affine into the Linear weights, cast to bf16, pad final layer."""
    folded = {}
    for li in range(1, NUM_LAYERS + 1):
        w = params[f"w{li}"] * params[f"s{li}"]        # (in, H) * (1, H)
        b = params[f"b{li}"] * params[f"s{li}"] + params[f"t{li}"]
        folded[f"w{li}"] = w.astype(jnp.bfloat16)
        folded[f"b{li}"] = b.astype(jnp.float32)
    # Split layer 1 along K so the two track sides can be fed separately
    # (avoids an extra HBM concat pass in the glue).
    folded["w1l"] = folded["w1"][:HALF_IN]
    folded["w1r"] = folded["w1"][HALF_IN:]
    # Narrow pad of the output layer (real columns 0..5, rest zero).
    w4 = jnp.zeros((HIDDEN, OUT_PAD), jnp.float32).at[:, :OUT_DIM].set(
        params["w4"])
    b4 = jnp.zeros((1, OUT_PAD), jnp.float32).at[:, :OUT_DIM].set(params["b4"])
    folded["w4p"] = w4.astype(jnp.bfloat16)
    folded["b4p"] = b4
    return folded


def mlp_planner_forward(track_left, track_right, folded):
    """track_left, track_right: (B, n_track, 2) -> waypoints (B, n_waypoints, 2)."""
    b = track_left.shape[0]
    # Cast once in XLA glue; the kernel consumes bf16 directly.
    xl = track_left.reshape(b, HALF_IN).astype(jnp.bfloat16)
    xr = track_right.reshape(b, HALF_IN).astype(jnp.bfloat16)

    # >= 2 grid steps so the "parallel" axis shards across both v7x TCs;
    # cap tile size so per-step overhead is amortized on large batches.
    num_tiles = max(2, pl.cdiv(b, MAX_TILE_B))
    tile_b = min(MAX_TILE_B,
                 max(MIN_TILE_B, _round_up(pl.cdiv(b, num_tiles), MIN_TILE_B)))
    b_pad = _round_up(b, tile_b)
    if b_pad != b:
        pad = b_pad - b
        xl = jnp.pad(xl, ((0, pad), (0, 0)))
        xr = jnp.pad(xr, ((0, pad), (0, 0)))
    grid = (b_pad // tile_b,)

    x_spec = pl.BlockSpec((tile_b, HALF_IN), lambda i: (i, 0))
    w1_spec = pl.BlockSpec((HALF_IN, HIDDEN), lambda i: (0, 0))
    wh_spec = pl.BlockSpec((HIDDEN, HIDDEN), lambda i: (0, 0))
    w4_spec = pl.BlockSpec((HIDDEN, OUT_PAD), lambda i: (0, 0))
    bh_spec = pl.BlockSpec((1, HIDDEN), lambda i: (0, 0))
    b4_spec = pl.BlockSpec((1, OUT_PAD), lambda i: (0, 0))
    out_spec = pl.BlockSpec((tile_b, OUT_PAD), lambda i: (i, 0))

    flops = 2 * b_pad * (IN_DIM * HIDDEN + 2 * HIDDEN * HIDDEN
                         + HIDDEN * OUT_PAD)
    weight_bytes = (2 * HALF_IN * HIDDEN * 2 + 2 * HIDDEN * HIDDEN * 2
                    + HIDDEN * OUT_PAD * 2 + 3 * HIDDEN * 4 + OUT_PAD * 4)
    bytes_accessed = b_pad * (IN_DIM * 2 + OUT_PAD * 4) + weight_bytes

    out = pl.pallas_call(
        mlp_planner_kernel,
        out_shape=jax.ShapeDtypeStruct((b_pad, OUT_PAD), jnp.float32),
        grid=grid,
        in_specs=[
            x_spec, x_spec,
            w1_spec, w1_spec, bh_spec,
            wh_spec, bh_spec,
            wh_spec, bh_spec,
            w4_spec, b4_spec,
        ],
        out_specs=out_spec,
        compiler_params=pltpu.CompilerParams(
            dimension_semantics=("parallel",),
            vmem_limit_bytes=32 * 1024 * 1024,
        ),
        cost_estimate=pl.CostEstimate(
            flops=flops, transcendentals=0, bytes_accessed=bytes_accessed),
    )(
        xl, xr,
        folded["w1l"], folded["w1r"], folded["b1"],
        folded["w2"], folded["b2"],
        folded["w3"], folded["b3"],
        folded["w4p"], folded["b4p"],
    )
    return out[:b, :OUT_DIM].reshape(b, N_WAYPOINTS, 2)


def reference_forward_f32(track_left, track_right, params):
    """Pure-JAX f32 reference of the eval-mode PyTorch forward."""
    b = track_left.shape[0]
    x = jnp.concatenate(
        [track_left.reshape(b, -1), track_right.reshape(b, -1)], axis=1)
    h = x
    for li in range(1, NUM_LAYERS + 1):
        h = h @ params[f"w{li}"] + params[f"b{li}"]
        h = h * params[f"s{li}"] + params[f"t{li}"]
        h = jnp.maximum(h, 0.0)
    out = h @ params["w4"] + params["b4"]
    return out.reshape(b, N_WAYPOINTS, 2)


def reference_forward_bf16(track_left, track_right, folded):
    """Pure-JAX reference that mimics the kernel's bf16/f32 precision."""
    b = track_left.shape[0]
    xl = track_left.reshape(b, HALF_IN).astype(jnp.bfloat16)
    xr = track_right.reshape(b, HALF_IN).astype(jnp.bfloat16)
    h = (jnp.dot(xl, folded["w1l"], preferred_element_type=jnp.float32)
         + jnp.dot(xr, folded["w1r"], preferred_element_type=jnp.float32))
    h = jnp.maximum(h + folded["b1"], 0.0)
    for li in (2, 3):
        h = jnp.dot(h.astype(jnp.bfloat16), folded[f"w{li}"],
                    preferred_element_type=jnp.float32)
        h = jnp.maximum(h + folded[f"b{li}"], 0.0)
    out = jnp.dot(h.astype(jnp.bfloat16), folded["w4p"],
                  preferred_element_type=jnp.float32) + folded["b4p"]
    return out[:, :OUT_DIM].reshape(b, N_WAYPOINTS, 2)


if __name__ == "__main__":
    key = jax.random.PRNGKey(0)
    k_params, k_left, k_right = jax.random.split(key, 3)

    B = 2
    track_left = jax.random.normal(k_left, (B, N_TRACK, 2), jnp.float32)
    track_right = jax.random.normal(k_right, (B, N_TRACK, 2), jnp.float32)

    params = init_params(k_params)
    folded = fold_params(params)

    waypoints = mlp_planner_forward(track_left, track_right, folded)
    waypoints = jax.block_until_ready(waypoints)
    assert waypoints.shape == (B, N_WAYPOINTS, 2)

    ref_bf16 = reference_forward_bf16(track_left, track_right, folded)
    ref_f32 = reference_forward_f32(track_left, track_right, params)
    assert jnp.allclose(waypoints, ref_bf16, atol=1e-2, rtol=1e-2)
    assert jnp.allclose(waypoints, ref_f32, atol=5e-2, rtol=5e-2)

    print("KERNEL_OK")
</pallas_src>

<mosaic_0001>
module attributes {stable_mosaic.version = 11 : i64} {
  func.func @mlp_planner_kernel(%arg0: i32, %arg1: memref<8x20xbf16, #tpu.memory_space<vmem>>, %arg2: memref<8x20xbf16, #tpu.memory_space<vmem>>, %arg3: memref<20x128xbf16, #tpu.memory_space<vmem>>, %arg4: memref<20x128xbf16, #tpu.memory_space<vmem>>, %arg5: memref<1x128xf32, #tpu.memory_space<vmem>>, %arg6: memref<128x128xbf16, #tpu.memory_space<vmem>>, %arg7: memref<1x128xf32, #tpu.memory_space<vmem>>, %arg8: memref<128x128xbf16, #tpu.memory_space<vmem>>, %arg9: memref<1x128xf32, #tpu.memory_space<vmem>>, %arg10: memref<128x8xbf16, #tpu.memory_space<vmem>>, %arg11: memref<1x8xf32, #tpu.memory_space<vmem>>, %arg12: memref<8x8xf32, #tpu.memory_space<vmem>>) attributes {dimension_semantics = [#tpu.dimension_semantics<parallel>], iteration_bounds = array<i64: 1>, scalar_prefetch = 0 : i64, scratch_operands = 0 : i64, tpu.core_type = #tpu.core_type<tc>, window_params = [{transform_indices = @transform_0, window_bounds = array<i64: 8, 20>}, {transform_indices = @transform_1, window_bounds = array<i64: 8, 20>}, {pipeline_mode = #tpu.pipeline_mode<synchronous>, transform_indices = @transform_2, window_bounds = array<i64: 20, 128>}, {pipeline_mode = #tpu.pipeline_mode<synchronous>, transform_indices = @transform_3, window_bounds = array<i64: 20, 128>}, {pipeline_mode = #tpu.pipeline_mode<synchronous>, transform_indices = @transform_4, window_bounds = array<i64: 1, 128>}, {pipeline_mode = #tpu.pipeline_mode<synchronous>, transform_indices = @transform_5, window_bounds = array<i64: 128, 128>}, {pipeline_mode = #tpu.pipeline_mode<synchronous>, transform_indices = @transform_6, window_bounds = array<i64: 1, 128>}, {pipeline_mode = #tpu.pipeline_mode<synchronous>, transform_indices = @transform_7, window_bounds = array<i64: 128, 128>}, {pipeline_mode = #tpu.pipeline_mode<synchronous>, transform_indices = @transform_8, window_bounds = array<i64: 1, 128>}, {pipeline_mode = #tpu.pipeline_mode<synchronous>, transform_indices = @transform_9, window_bounds = array<i64: 128, 8>}, {pipeline_mode = #tpu.pipeline_mode<synchronous>, transform_indices = @transform_10, window_bounds = array<i64: 1, 8>}, {transform_indices = @transform_11, window_bounds = array<i64: 8, 8>}]} {
    %c0 = arith.constant 0 : index
    %c0_0 = arith.constant 0 : index
    %0 = vector.load %arg1[%c0, %c0_0] : memref<8x20xbf16, #tpu.memory_space<vmem>>, vector<8x20xbf16>
    %c0_1 = arith.constant 0 : index
    %c0_2 = arith.constant 0 : index
    %1 = vector.load %arg3[%c0_1, %c0_2] : memref<20x128xbf16, #tpu.memory_space<vmem>>, vector<20x128xbf16>
    %cst = arith.constant dense<0.000000e+00> : vector<8x128xf32>
    %2 = tpu.matmul %0, %1, %cst {dimension_numbers = #tpu.dot_dimension_numbers<[1], [0], [0], [1], [0, 0, 1, 1], [], []>} : vector<8x20xbf16>, vector<20x128xbf16>, vector<8x128xf32> -> vector<8x128xf32>
    %c0_3 = arith.constant 0 : index
    %c0_4 = arith.constant 0 : index
    %3 = vector.load %arg2[%c0_3, %c0_4] : memref<8x20xbf16, #tpu.memory_space<vmem>>, vector<8x20xbf16>
    %c0_5 = arith.constant 0 : index
    %c0_6 = arith.constant 0 : index
    %4 = vector.load %arg4[%c0_5, %c0_6] : memref<20x128xbf16, #tpu.memory_space<vmem>>, vector<20x128xbf16>
    %cst_7 = arith.constant dense<0.000000e+00> : vector<8x128xf32>
    %5 = tpu.matmul %3, %4, %cst_7 {dimension_numbers = #tpu.dot_dimension_numbers<[1], [0], [0], [1], [0, 0, 1, 1], [], []>} : vector<8x20xbf16>, vector<20x128xbf16>, vector<8x128xf32> -> vector<8x128xf32>
    %6 = arith.addf %2, %5 : vector<8x128xf32>
    %c0_8 = arith.constant 0 : index
    %c0_9 = arith.constant 0 : index
    %7 = vector.load %arg5[%c0_8, %c0_9] : memref<1x128xf32, #tpu.memory_space<vmem>>, vector<1x128xf32>
    %8 = vector.broadcast %7 : vector<1x128xf32> to vector<8x128xf32>
    %9 = arith.addf %6, %8 : vector<8x128xf32>
    %cst_10 = arith.constant 0.000000e+00 : f32
    %10 = vector.broadcast %cst_10 : f32 to vector<8x128xf32>
    %11 = arith.maximumf %9, %10 : vector<8x128xf32>
    %12 = arith.truncf %11 : vector<8x128xf32> to vector<8x128xbf16>
    %c0_11 = arith.constant 0 : index
    %c0_12 = arith.constant 0 : index
    %13 = vector.load %arg6[%c0_11, %c0_12] : memref<128x128xbf16, #tpu.memory_space<vmem>>, vector<128x128xbf16>
    %cst_13 = arith.constant dense<0.000000e+00> : vector<8x128xf32>
    %14 = tpu.matmul %12, %13, %cst_13 {dimension_numbers = #tpu.dot_dimension_numbers<[1], [0], [0], [1], [0, 0, 1, 1], [], []>} : vector<8x128xbf16>, vector<128x128xbf16>, vector<8x128xf32> -> vector<8x128xf32>
    %c0_14 = arith.constant 0 : index
    %c0_15 = arith.constant 0 : index
    %15 = vector.load %arg7[%c0_14, %c0_15] : memref<1x128xf32, #tpu.memory_space<vmem>>, vector<1x128xf32>
    %16 = vector.broadcast %15 : vector<1x128xf32> to vector<8x128xf32>
    %17 = arith.addf %14, %16 : vector<8x128xf32>
    %cst_16 = arith.constant 0.000000e+00 : f32
    %18 = vector.broadcast %cst_16 : f32 to vector<8x128xf32>
    %19 = arith.maximumf %17, %18 : vector<8x128xf32>
    %20 = arith.truncf %19 : vector<8x128xf32> to vector<8x128xbf16>
    %c0_17 = arith.constant 0 : index
    %c0_18 = arith.constant 0 : index
    %21 = vector.load %arg8[%c0_17, %c0_18] : memref<128x128xbf16, #tpu.memory_space<vmem>>, vector<128x128xbf16>
    %cst_19 = arith.constant dense<0.000000e+00> : vector<8x128xf32>
    %22 = tpu.matmul %20, %21, %cst_19 {dimension_numbers = #tpu.dot_dimension_numbers<[1], [0], [0], [1], [0, 0, 1, 1], [], []>} : vector<8x128xbf16>, vector<128x128xbf16>, vector<8x128xf32> -> vector<8x128xf32>
    %c0_20 = arith.constant 0 : index
    %c0_21 = arith.constant 0 : index
    %23 = vector.load %arg9[%c0_20, %c0_21] : memref<1x128xf32, #tpu.memory_space<vmem>>, vector<1x128xf32>
    %24 = vector.broadcast %23 : vector<1x128xf32> to vector<8x128xf32>
    %25 = arith.addf %22, %24 : vector<8x128xf32>
    %cst_22 = arith.constant 0.000000e+00 : f32
    %26 = vector.broadcast %cst_22 : f32 to vector<8x128xf32>
    %27 = arith.maximumf %25, %26 : vector<8x128xf32>
    %28 = arith.truncf %27 : vector<8x128xf32> to vector<8x128xbf16>
    %c0_23 = arith.constant 0 : index
    %c0_24 = arith.constant 0 : index
    %29 = vector.load %arg10[%c0_23, %c0_24] : memref<128x8xbf16, #tpu.memory_space<vmem>>, vector<128x8xbf16>
    %cst_25 = arith.constant dense<0.000000e+00> : vector<8x8xf32>
    %30 = tpu.matmul %28, %29, %cst_25 {dimension_numbers = #tpu.dot_dimension_numbers<[1], [0], [0], [1], [0, 0, 1, 1], [], []>} : vector<8x128xbf16>, vector<128x8xbf16>, vector<8x8xf32> -> vector<8x8xf32>
    %c0_26 = arith.constant 0 : index
    %c0_27 = arith.constant 0 : index
    %31 = vector.load %arg11[%c0_26, %c0_27] : memref<1x8xf32, #tpu.memory_space<vmem>>, vector<1x8xf32>
    %32 = vector.broadcast %31 : vector<1x8xf32> to vector<8x8xf32>
    %33 = arith.addf %30, %32 : vector<8x8xf32>
    %c0_28 = arith.constant 0 : index
    %c0_29 = arith.constant 0 : index
    %34 = vector.load %arg12[%c0_28, %c0_29] : memref<8x8xf32, #tpu.memory_space<vmem>>, vector<8x8xf32>
    tpu.vector_store %arg12[%c0_28, %c0_29], %33 {strides = array<i32>} : memref<8x8xf32, #tpu.memory_space<vmem>>, vector<8x8xf32>,
    return
  }
  func.func @transform_0(%arg0: i32) -> (i32, i32) {
    %c0_i32 = arith.constant 0 : i32
    %c0_i32_0 = arith.constant 0 : i32
    return %arg0, %c0_i32 : i32, i32
  }
  func.func @transform_1(%arg0: i32) -> (i32, i32) {
    %c0_i32 = arith.constant 0 : i32
    %c0_i32_0 = arith.constant 0 : i32
    return %arg0, %c0_i32 : i32, i32
  }
  func.func @transform_2(%arg0: i32) -> (i32, i32) {
    %c0_i32 = arith.constant 0 : i32
    %c0_i32_0 = arith.constant 0 : i32
    %c0_i32_1 = arith.constant 0 : i32
    return %c0_i32, %c0_i32_0 : i32, i32
  }
  func.func @transform_3(%arg0: i32) -> (i32, i32) {
    %c0_i32 = arith.constant 0 : i32
    %c0_i32_0 = arith.constant 0 : i32
    %c0_i32_1 = arith.constant 0 : i32
    return %c0_i32, %c0_i32_0 : i32, i32
  }
  func.func @transform_4(%arg0: i32) -> (i32, i32) {
    %c0_i32 = arith.constant 0 : i32
    %c0_i32_0 = arith.constant 0 : i32
    %c0_i32_1 = arith.constant 0 : i32
    return %c0_i32, %c0_i32_0 : i32, i32
  }
  func.func @transform_5(%arg0: i32) -> (i32, i32) {
    %c0_i32 = arith.constant 0 : i32
    %c0_i32_0 = arith.constant 0 : i32
    %c0_i32_1 = arith.constant 0 : i32
    return %c0_i32, %c0_i32_0 : i32, i32
  }
  func.func @transform_6(%arg0: i32) -> (i32, i32) {
    %c0_i32 = arith.constant 0 : i32
    %c0_i32_0 = arith.constant 0 : i32
    %c0_i32_1 = arith.constant 0 : i32
    return %c0_i32, %c0_i32_0 : i32, i32
  }
  func.func @transform_7(%arg0: i32) -> (i32, i32) {
    %c0_i32 = arith.constant 0 : i32
    %c0_i32_0 = arith.constant 0 : i32
    %c0_i32_1 = arith.constant 0 : i32
    return %c0_i32, %c0_i32_0 : i32, i32
  }
  func.func @transform_8(%arg0: i32) -> (i32, i32) {
    %c0_i32 = arith.constant 0 : i32
    %c0_i32_0 = arith.constant 0 : i32
    %c0_i32_1 = arith.constant 0 : i32
    return %c0_i32, %c0_i32_0 : i32, i32
  }
  func.func @transform_9(%arg0: i32) -> (i32, i32) {
    %c0_i32 = arith.constant 0 : i32
    %c0_i32_0 = arith.constant 0 : i32
    %c0_i32_1 = arith.constant 0 : i32
    return %c0_i32, %c0_i32_0 : i32, i32
  }
  func.func @transform_10(%arg0: i32) -> (i32, i32) {
    %c0_i32 = arith.constant 0 : i32
    %c0_i32_0 = arith.constant 0 : i32
    %c0_i32_1 = arith.constant 0 : i32
    return %c0_i32, %c0_i32_0 : i32, i32
  }
  func.func @transform_11(%arg0: i32) -> (i32, i32) {
    %c0_i32 = arith.constant 0 : i32
    %c0_i32_0 = arith.constant 0 : i32
    return %arg0, %c0_i32 : i32, i32
  }
}

</mosaic_0001>

<llo_original>
// kernel: tpu_custom_call.1
$region0: #{tpu_custom_call.1}
  #allocation0 [shape = 'u32[]', space=smem, size = 0x4, offset = 0x4, fixed_abs, tag = 'smem constant byte address 0x4 - core index']
  #allocation1 [shape = 'u32[144,128]{1,0:T(1,128)}', space=vmem, size = 0x12000, scoped, tag = 'internal scratch']
  %s0 = inlined_call_operand.hbm [shape: bf16[8,20], index: 0, kind: input, shape index: {}]
  %s1 = inlined_call_operand.hbm [shape: bf16[8,20], index: 1, kind: input, shape index: {}]
  %s2 = inlined_call_operand.vmem [shape: bf16[20,128], index: 2, kind: input, shape index: {}]
  %s3 = inlined_call_operand.hbm [shape: bf16[20,128], index: 3, kind: input, shape index: {}]
  %s4 = inlined_call_operand.hbm [shape: f32[1,128], index: 4, kind: input, shape index: {}]
  %s5 = inlined_call_operand.vmem [shape: bf16[128,128], index: 5, kind: input, shape index: {}]
  %s6 = inlined_call_operand.hbm [shape: f32[1,128], index: 6, kind: input, shape index: {}]
  %s7 = inlined_call_operand.hbm [shape: bf16[128,128], index: 7, kind: input, shape index: {}]
  %s8 = inlined_call_operand.vmem [shape: f32[1,128], index: 8, kind: input, shape index: {}]
  %s9 = inlined_call_operand.vmem [shape: bf16[128,8], index: 9, kind: input, shape index: {}]
  %s10 = inlined_call_operand.vmem [shape: f32[1,8], index: 10, kind: input, shape index: {}]
  %s11 = inlined_call_operand.hbm [shape: f32[8,8], index: 11, kind: output, shape index: {}]
  %s12 = sld [smem:[#allocation0]]
  $region78: #{tpu_custom_call.1} parent=0
    _
  %s14 = ssub.s32 1, %s12
  %s15 = scalar_select 0, %s14, %s12
  $region1: #{tpu_custom_call.1} parent=0
    #allocation2 [shape = 'u8[2048]{0}', space=vmem, size = 0x800, scoped, tag = 'input window, operand 0, single buffered']
    #allocation3 [shape = 's32[1]{0}', space=sflag, size = 0x4, scoped, tag = 'scoped memory for tpu_custom_call.1']
    #allocation4 [shape = 's32[1]{0}', space=sflag, size = 0x4, scoped, tag = 'scoped memory for tpu_custom_call.1']
    #allocation5 [shape = 'u8[2048]{0}', space=vmem, size = 0x800, scoped, tag = 'input window, operand 1, single buffered']
    #allocation6 [shape = 's32[1]{0}', space=sflag, size = 0x4, scoped, tag = 'scoped memory for tpu_custom_call.1']
    #allocation7 [shape = 'u8[6144]{0}', space=vmem, size = 0x1800, scoped, tag = 'input window, operand 3, single buffered']
    #allocation8 [shape = 'u8[512]{0}', space=vmem, size = 0x400, scoped, tag = 'input window, operand 4, single buffered']
    #allocation9 [shape = 's32[1]{0}', space=sflag, size = 0x4, scoped, tag = 'scoped memory for tpu_custom_call.1']
    #allocation10 [shape = 'u8[512]{0}', space=vmem, size = 0x400, scoped, tag = 'input window, operand 6, single buffered']
    #allocation11 [shape = 'u8[32768]{0}', space=vmem, size = 0x8000, scoped, tag = 'input window, operand 7, single buffered']
    #allocation12 [shape = 's32[1]{0}', space=sflag, size = 0x4, scoped, tag = 'scoped memory for tpu_custom_call.1']
    #allocation13 [shape = 'u8[4096]{0}', space=vmem, size = 0x1000, scoped, tag = 'output window, operand 0, single buffered']
    %16 = vsyncpa [#allocation3], 0
    %17 = vsyncpa [#allocation6], 0
    %18 = vsyncpa [#allocation9], 0
    %19 = vsyncpa [#allocation12], 0
    %20 = vsyncpa [#allocation4], 0
    // Predicated region
    $region2: #{tpu_custom_call.1} parent=1 // pred_check
      _
    $region3: #{tpu_custom_call.1} parent=1 // pred_check_branch
      %22 = sbr.rel (0) target = $region5
    $region4: #{tpu_custom_call.1} parent=1 // pred_region
      %s24 = ssub.s32 64, 64
      %25 = vsyncadd [#allocation3], %s24
      %s27 = sshll.u32 [#allocation2], 4
      %s28 = int_to_ptr.vmem [resolvable:$true] %s27
      %30 = dma.hbm_to_vmem [thread:$0]  %s0, 64, %s28, [#allocation3]
    $region5: #{tpu_custom_call.1} parent=1 // pred_fallthru
      _
    // Predicated region
    $region6: #{tpu_custom_call.1} parent=1 // pred_check
      _
    $region7: #{tpu_custom_call.1} parent=1 // pred_check_branch
      %32 = sbr.rel (0) target = $region9
    $region8: #{tpu_custom_call.1} parent=1 // pred_region
      %s34 = ssub.s32 64, 64
      %35 = vsyncadd [#allocation6], %s34
      %s37 = sshll.u32 [#allocation5], 4
      %s38 = int_to_ptr.vmem [resolvable:$true] %s37
      %40 = dma.hbm_to_vmem [thread:$0]  %s1, 64, %s38, [#allocation6]
    $region9: #{tpu_custom_call.1} parent=1 // pred_fallthru
      _
    // Predicated region
    $region10: #{tpu_custom_call.1} parent=1 // pred_check
      _
    $region11: #{tpu_custom_call.1} parent=1 // pred_check_branch
      %42 = sbr.rel (0) target = $region13
    $region12: #{tpu_custom_call.1} parent=1 // pred_region
      _
    $region13: #{tpu_custom_call.1} parent=1 // pred_fallthru
      _
    // Predicated region
    $region14: #{tpu_custom_call.1} parent=1 // pred_check
      _
    $region15: #{tpu_custom_call.1} parent=1 // pred_check_branch
      %44 = sbr.rel (0) target = $region17
    $region16: #{tpu_custom_call.1} parent=1 // pred_region
      %s46 = ssub.s32 192, 192
      %47 = vsyncadd [#allocation6], %s46
      %s48 = sshll.u32 [#allocation7], 4
      %s49 = int_to_ptr.vmem [resolvable:$true] %s48
      %54 = dma.hbm_to_vmem [thread:$0]  %s3, 192, %s49, [#allocation6], 64, 64, 4
    $region17: #{tpu_custom_call.1} parent=1 // pred_fallthru
      _
    // Predicated region
    $region18: #{tpu_custom_call.1} parent=1 // pred_check
      _
    $region19: #{tpu_custom_call.1} parent=1 // pred_check_branch
      %56 = sbr.rel (0) target = $region21
    $region20: #{tpu_custom_call.1} parent=1 // pred_region
      %s58 = ssub.s32 16, 16
      %59 = vsyncadd [#allocation9], %s58
      %s61 = sshll.u32 [#allocation8], 4
      %s62 = int_to_ptr.vmem [resolvable:$true] %s61
      %64 = dma.hbm_to_vmem [thread:$0]  %s4, 16, %s62, [#allocation9]
    $region21: #{tpu_custom_call.1} parent=1 // pred_fallthru
      _
    // Predicated region
    $region22: #{tpu_custom_call.1} parent=1 // pred_check
      _
    $region23: #{tpu_custom_call.1} parent=1 // pred_check_branch
      %66 = sbr.rel (0) target = $region25
    $region24: #{tpu_custom_call.1} parent=1 // pred_region
      _
    $region25: #{tpu_custom_call.1} parent=1 // pred_fallthru
      _
    // Predicated region
    $region26: #{tpu_custom_call.1} parent=1 // pred_check
      _
    $region27: #{tpu_custom_call.1} parent=1 // pred_check_branch
      %68 = sbr.rel (0) target = $region29
    $region28: #{tpu_custom_call.1} parent=1 // pred_region
      %s70 = ssub.s32 16, 16
      %71 = vsyncadd [#allocation9], %s70
      %s73 = sshll.u32 [#allocation10], 4
      %s74 = int_to_ptr.vmem [resolvable:$true] %s73
      %76 = dma.hbm_to_vmem [thread:$0]  %s6, 16, %s74, [#allocation9]
    $region29: #{tpu_custom_call.1} parent=1 // pred_fallthru
      _
    // Predicated region
    $region30: #{tpu_custom_call.1} parent=1 // pred_check
      _
    $region31: #{tpu_custom_call.1} parent=1 // pred_check_branch
      %78 = sbr.rel (0) target = $region33
    $region32: #{tpu_custom_call.1} parent=1 // pred_region
      %s80 = ssub.s32 1024, 1024
      %81 = vsyncadd [#allocation12], %s80
      %s82 = sshll.u32 [#allocation11], 4
      %s83 = int_to_ptr.vmem [resolvable:$true] %s82
      %88 = dma.hbm_to_vmem [thread:$0]  %s7, 1024, %s83, [#allocation12], 64, 64, 4
    $region33: #{tpu_custom_call.1} parent=1 // pred_fallthru
      _
    // Predicated region
    $region34: #{tpu_custom_call.1} parent=1 // pred_check
      _
    $region35: #{tpu_custom_call.1} parent=1 // pred_check_branch
      %90 = sbr.rel (0) target = $region37
    $region36: #{tpu_custom_call.1} parent=1 // pred_region
      _
    $region37: #{tpu_custom_call.1} parent=1 // pred_fallthru
      _
    // Predicated region
    $region38: #{tpu_custom_call.1} parent=1 // pred_check
      _
    $region39: #{tpu_custom_call.1} parent=1 // pred_check_branch
      %92 = sbr.rel (0) target = $region41
    $region40: #{tpu_custom_call.1} parent=1 // pred_region
      _
    $region41: #{tpu_custom_call.1} parent=1 // pred_fallthru
      _
    // Predicated region
    $region42: #{tpu_custom_call.1} parent=1 // pred_check
      _
    $region43: #{tpu_custom_call.1} parent=1 // pred_check_branch
      %94 = sbr.rel (0) target = $region45
    $region44: #{tpu_custom_call.1} parent=1 // pred_region
      _
    $region45: #{tpu_custom_call.1} parent=1 // pred_fallthru
      _
    // Predicated region
    $region46: #{tpu_custom_call.1} parent=1 // pred_check
      _
    $region47: #{tpu_custom_call.1} parent=1 // pred_check_branch
      %96 = sbr.rel (0) target = $region49
    $region48: #{tpu_custom_call.1} parent=1 // pred_region
      %97 = dma.done [#allocation3], 64
    $region49: #{tpu_custom_call.1} parent=1 // pred_fallthru
      _
    // Predicated region
    $region50: #{tpu_custom_call.1} parent=1 // pred_check
      _
    $region51: #{tpu_custom_call.1} parent=1 // pred_check_branch
      %99 = sbr.rel (0) target = $region53
    $region52: #{tpu_custom_call.1} parent=1 // pred_region
      %100 = dma.done [#allocation6], 64
    $region53: #{tpu_custom_call.1} parent=1 // pred_fallthru
      _
    // Predicated region
    $region54: #{tpu_custom_call.1} parent=1 // pred_check
      _
    $region55: #{tpu_custom_call.1} parent=1 // pred_check_branch
      %102 = sbr.rel (0) target = $region57
    $region56: #{tpu_custom_call.1} parent=1 // pred_region
      %103 = dma.done [#allocation6], 192
    $region57: #{tpu_custom_call.1} parent=1 // pred_fallthru
      _
    // Predicated region
    $region58: #{tpu_custom_call.1} parent=1 // pred_check
      _
    $region59: #{tpu_custom_call.1} parent=1 // pred_check_branch
      %105 = sbr.rel (0) target = $region61
    $region60: #{tpu_custom_call.1} parent=1 // pred_region
      %106 = dma.done [#allocation9], 16
    $region61: #{tpu_custom_call.1} parent=1 // pred_fallthru
      _
    // Predicated region
    $region62: #{tpu_custom_call.1} parent=1 // pred_check
      _
    $region63: #{tpu_custom_call.1} parent=1 // pred_check_branch
      %108 = sbr.rel (0) target = $region65
    $region64: #{tpu_custom_call.1} parent=1 // pred_region
      %109 = dma.done [#allocation9], 16
    $region65: #{tpu_custom_call.1} parent=1 // pred_fallthru
      _
    // Predicated region
    $region66: #{tpu_custom_call.1} parent=1 // pred_check
      _
    $region67: #{tpu_custom_call.1} parent=1 // pred_check_branch
      %111 = sbr.rel (0) target = $region69
    $region68: #{tpu_custom_call.1} parent=1 // pred_region
      %112 = dma.done [#allocation12], 1024
    $region69: #{tpu_custom_call.1} parent=1 // pred_fallthru
      _
    %v114 = vld [vmem:[#allocation2] sm:$0xf]
    %v115 = vld [vmem:[%s2] sm:$0xf]
    %v116 = vld [vmem:[%s2 + $0x4] sm:$0xf]
    %v117 = vld [vmem:[%s2 + $0x8] sm:$0x3]
    %v118 = vld [vmem:[#allocation5] sm:$0xf]
    %v119 = vld [vmem:[#allocation7] sm:$0xf]
    %v120 = vld [vmem:[#allocation7 + $0x4] sm:$0xf]
    %v121 = vld [vmem:[#allocation7 + $0x8] sm:$0x3]
    %v125 = vunpack.c.l.b16 %v119
    %v126 = vunpack.c.l.b16 %v120
    %v127 = vunpack.c.l.b16 %v121
    %v128 = vpack.c.b16 %v126, %v125
    %v129 = vpack.c.b16 %v127, %v127
    %vm131 = vcmask 162816
    %v133 = vsel %vm131, %v118, 0
    %vm135 = vcmask 1041408
    %v137 = vsel %vm135, %v129, 0
    %139 = vmatprep.subr.bf16.mxu0 0
    %140 = vmatpush1.bf16.msra.mxu0 0
    %141 = vmatprep.subr.bf16.mxu0 0
    %142 = vmatpush1.bf16.msra.mxu0 0
    %143 = vmatprep.subr.bf16.mxu0 0
    %144 = vmatpush1.bf16.msra.mxu0 0
    %145 = vmatprep.subr.bf16.mxu0 0
    %146 = vmatpush1.bf16.msra.mxu0 0
    %147 = vmatprep.subr.bf16.mxu0 0
    %148 = vmatpush1.bf16.msra.mxu0 0
    %149 = vmatprep.subr.bf16.mxu0 0
    %150 = vmatpush1.bf16.msra.mxu0 0
    %151 = vmatprep.subr.bf16.mxu0 0
    %152 = vmatpush1.bf16.msra.mxu0 %v137
    %153 = vmatprep.subr.bf16.mxu0 0
    %154 = vmatpush1.bf16.msra.mxu0 %v128
    %155 = vmatprep.subr.bf16.mxu0 0
    %156 = vmatpush2.bf16.msra.mxu0 0
    %157 = vmatprep.subr.bf16.mxu0 0
    %158 = vmatpush2.bf16.msra.mxu0 0
    %159 = vmatprep.subr.bf16.mxu0 0
    %160 = vmatpush2.bf16.msra.mxu0 0
    %161 = vmatprep.subr.bf16.mxu0 0
    %162 = vmatpush2.bf16.msra.mxu0 0
    %163 = vmatprep.subr.bf16.mxu0 0
    %164 = vmatpush2.bf16.msra.mxu0 0
    %165 = vmatprep.subr.bf16.mxu0 0
    %166 = vmatpush2.bf16.msra.mxu0 0
    %167 = vmatprep.subr.bf16.mxu0 0
    %168 = vmatpush2.bf16.msra.mxu0 0
    %169 = vmatprep.subr.bf16.mxu0 0
    %170 = vmatpush2.bf16.msra.mxu0 0
    %171 = vmatprep.mubr.bf16.mxu0 0
    %172 = vmatmul.mubr.bf16.gmra.mxu0 %v133
    %v173 = vpop.f32.mrf.mxu0
    %v174 = vadd.f32 0.0, %v173
    %v175 = vpop.f32.mrf.mxu0
    %v176 = vpop.f32.mrf.mxu0
    %v177 = vpop.f32.mrf.mxu0
    %178 = vdwg.mxu0
    %v182 = vunpack.c.l.b16 %v115
    %v183 = vunpack.c.l.b16 %v116
    %v184 = vunpack.c.l.b16 %v117
    %v185 = vpack.c.b16 %v183, %v182
    %v186 = vpack.c.b16 %v184, %v184
    %v189 = vsel %vm131, %v114, 0
    %v192 = vsel %vm135, %v186, 0
    %194 = vmatprep.subr.bf16.mxu0 0
    %195 = vmatpush1.bf16.msra.mxu0 0
    %196 = vmatprep.subr.bf16.mxu0 0
    %197 = vmatpush1.bf16.msra.mxu0 0
    %198 = vmatprep.subr.bf16.mxu0 0
    %199 = vmatpush1.bf16.msra.mxu0 0
    %200 = vmatprep.subr.bf16.mxu0 0
    %201 = vmatpush1.bf16.msra.mxu0 0
    %202 = vmatprep.subr.bf16.mxu0 0
    %203 = vmatpush1.bf16.msra.mxu0 0
    %204 = vmatprep.subr.bf16.mxu0 0
    %205 = vmatpush1.bf16.msra.mxu0 0
    %206 = vmatprep.subr.bf16.mxu0 0
    %207 = vmatpush1.bf16.msra.mxu0 %v192
    %208 = vmatprep.subr.bf16.mxu0 0
    %209 = vmatpush1.bf16.msra.mxu0 %v185
    %210 = vmatprep.subr.bf16.mxu0 0
    %211 = vmatpush2.bf16.msra.mxu0 0
    %212 = vmatprep.subr.bf16.mxu0 0
    %213 = vmatpush2.bf16.msra.mxu0 0
    %214 = vmatprep.subr.bf16.mxu0 0
    %215 = vmatpush2.bf16.msra.mxu0 0
    %216 = vmatprep.subr.bf16.mxu0 0
    %217 = vmatpush2.bf16.msra.mxu0 0
    %218 = vmatprep.subr.bf16.mxu0 0
    %219 = vmatpush2.bf16.msra.mxu0 0
    %220 = vmatprep.subr.bf16.mxu0 0
    %221 = vmatpush2.bf16.msra.mxu0 0
    %222 = vmatprep.subr.bf16.mxu0 0
    %223 = vmatpush2.bf16.msra.mxu0 0
    %224 = vmatprep.subr.bf16.mxu0 0
    %225 = vmatpush2.bf16.msra.mxu0 0
    %226 = vmatprep.mubr.bf16.mxu0 0
    %227 = vmatmul.mubr.bf16.gmra.mxu0 %v189
    %v228 = vpop.f32.mrf.mxu0
    %v229 = vadd.f32 %v174, %v228
    %v230 = vpop.f32.mrf.mxu0
    %v231 = vpop.f32.mrf.mxu0
    %v232 = vpop.f32.mrf.mxu0
    %233 = vdwg.mxu0
    %v234 = vld [vmem:[#allocation8] sm:$0x1]
    %v236 = vlaneseq
    %v237 = vshrl.u32 %v236, 7
    %v238 = vsub.s32 0, %v237
    %v239 = vrot.slane %v234, %v238
    %v241 = vadd.f32 %v229, %v239
    %v242 = vmax.f32 %v241, 0.0
    %v243 = vpack.c.bf16 %v242, %v242
    %v244 = vld [vmem:[%s5] sm:$0xf]
    %v245 = vld [vmem:[%s5 + $0x4] sm:$0xf]
    %v246 = vld [vmem:[%s5 + $0x8] sm:$0xf]
    %v247 = vld [vmem:[%s5 + $0xc] sm:$0xf]
    %v248 = vld [vmem:[%s5 + $0x10] sm:$0xf]
    %v249 = vld [vmem:[%s5 + $0x14] sm:$0xf]
    %v250 = vld [vmem:[%s5 + $0x18] sm:$0xf]
    %v251 = vld [vmem:[%s5 + $0x1c] sm:$0xf]
    %v252 = vld [vmem:[%s5 + $0x20] sm:$0xf]
    %v253 = vld [vmem:[%s5 + $0x24] sm:$0xf]
    %v254 = vld [vmem:[%s5 + $0x28] sm:$0xf]
    %v255 = vld [vmem:[%s5 + $0x2c] sm:$0xf]
    %v256 = vld [vmem:[%s5 + $0x30] sm:$0xf]
    %v257 = vld [vmem:[%s5 + $0x34] sm:$0xf]
    %v258 = vld [vmem:[%s5 + $0x38] sm:$0xf]
    %v259 = vld [vmem:[%s5 + $0x3c] sm:$0xf]
    %v260 = vld [vmem:[#allocation10] sm:$0x1]
    %v262 = vlaneseq
    %v263 = vshrl.u32 %v262, 7
    %v264 = vsub.s32 0, %v263
    %v265 = vrot.slane %v260, %v264
    %v283 = vunpack.c.l.b16 %v244
    %v284 = vunpack.c.l.b16 %v245
    %v285 = vunpack.c.l.b16 %v246
    %v286 = vunpack.c.l.b16 %v247
    %v287 = vunpack.c.l.b16 %v248
    %v288 = vunpack.c.l.b16 %v249
    %v289 = vunpack.c.l.b16 %v250
    %v290 = vunpack.c.l.b16 %v251
    %v291 = vunpack.c.l.b16 %v252
    %v292 = vunpack.c.l.b16 %v253
    %v293 = vunpack.c.l.b16 %v254
    %v294 = vunpack.c.l.b16 %v255
    %v295 = vunpack.c.l.b16 %v256
    %v296 = vunpack.c.l.b16 %v257
    %v297 = vunpack.c.l.b16 %v258
    %v298 = vunpack.c.l.b16 %v259
    %v299 = vpack.c.b16 %v284, %v283
    %v300 = vpack.c.b16 %v286, %v285
    %v301 = vpack.c.b16 %v288, %v287
    %v302 = vpack.c.b16 %v290, %v289
    %v303 = vpack.c.b16 %v292, %v291
    %v304 = vpack.c.b16 %v294, %v293
    %v305 = vpack.c.b16 %v296, %v295
    %v306 = vpack.c.b16 %v298, %v297
    %315 = vmatprep.subr.bf16.mxu0 0
    %316 = vmatpush1.bf16.msra.mxu0 %v306
    %317 = vmatprep.subr.bf16.mxu0 0
    %318 = vmatpush1.bf16.msra.mxu0 %v305
    %319 = vmatprep.subr.bf16.mxu0 0
    %320 = vmatpush1.bf16.msra.mxu0 %v304
    %321 = vmatprep.subr.bf16.mxu0 0
    %322 = vmatpush1.bf16.msra.mxu0 %v303
    %323 = vmatprep.subr.bf16.mxu0 0
    %324 = vmatpush1.bf16.msra.mxu0 %v302
    %325 = vmatprep.subr.bf16.mxu0 0
    %326 = vmatpush1.bf16.msra.mxu0 %v301
    %327 = vmatprep.subr.bf16.mxu0 0
    %328 = vmatpush1.bf16.msra.mxu0 %v300
    %329 = vmatprep.subr.bf16.mxu0 0
    %330 = vmatpush1.bf16.msra.mxu0 %v299
    %331 = vmatprep.subr.bf16.mxu0 0
    %332 = vmatpush2.bf16.msra.mxu0 0
    %333 = vmatprep.subr.bf16.mxu0 0
    %334 = vmatpush2.bf16.msra.mxu0 0
    %335 = vmatprep.subr.bf16.mxu0 0
    %336 = vmatpush2.bf16.msra.mxu0 0
    %337 = vmatprep.subr.bf16.mxu0 0
    %338 = vmatpush2.bf16.msra.mxu0 0
    %339 = vmatprep.subr.bf16.mxu0 0
    %340 = vmatpush2.bf16.msra.mxu0 0
    %341 = vmatprep.subr.bf16.mxu0 0
    %342 = vmatpush2.bf16.msra.mxu0 0
    %343 = vmatprep.subr.bf16.mxu0 0
    %344 = vmatpush2.bf16.msra.mxu0 0
    %345 = vmatprep.subr.bf16.mxu0 0
    %346 = vmatpush2.bf16.msra.mxu0 0
    %347 = vmatprep.mubr.bf16.mxu0 0
    %348 = vmatmul.mubr.bf16.gmra.mxu0 %v243
    %v349 = vpop.f32.mrf.mxu0
    %v350 = vadd.f32 %v265, %v349
    %v351 = vpop.f32.mrf.mxu0
    %v352 = vpop.f32.mrf.mxu0
    %v353 = vpop.f32.mrf.mxu0
    %354 = vdwg.mxu0
    %v355 = vmax.f32 %v350, 0.0
    %v356 = vpack.c.bf16 %v355, %v355
    %v357 = vld [vmem:[#allocation11] sm:$0xf]
    %v358 = vld [vmem:[#allocation11 + $0x4] sm:$0xf]
    %v359 = vld [vmem:[#allocation11 + $0x8] sm:$0xf]
    %v360 = vld [vmem:[#allocation11 + $0xc] sm:$0xf]
    %v361 = vld [vmem:[#allocation11 + $0x10] sm:$0xf]
    %v362 = vld [vmem:[#allocation11 + $0x14] sm:$0xf]
    %v363 = vld [vmem:[#allocation11 + $0x18] sm:$0xf]
    %v364 = vld [vmem:[#allocation11 + $0x1c] sm:$0xf]
    %v365 = vld [vmem:[#allocation11 + $0x20] sm:$0xf]
    %v366 = vld [vmem:[#allocation11 + $0x24] sm:$0xf]
    %v367 = vld [vmem:[#allocation11 + $0x28] sm:$0xf]
    %v368 = vld [vmem:[#allocation11 + $0x2c] sm:$0xf]
    %v369 = vld [vmem:[#allocation11 + $0x30] sm:$0xf]
    %v370 = vld [vmem:[#allocation11 + $0x34] sm:$0xf]
    %v371 = vld [vmem:[#allocation11 + $0x38] sm:$0xf]
    %v372 = vld [vmem:[#allocation11 + $0x3c] sm:$0xf]
    %v373 = vld [vmem:[%s8] sm:$0x1]
    %v375 = vlaneseq
    %v376 = vshrl.u32 %v375, 7
    %v377 = vsub.s32 0, %v376
    %v378 = vrot.slane %v373, %v377
    %v396 = vunpack.c.l.b16 %v357
    %v397 = vunpack.c.l.b16 %v358
    %v398 = vunpack.c.l.b16 %v359
    %v399 = vunpack.c.l.b16 %v360
    %v400 = vunpack.c.l.b16 %v361
    %v401 = vunpack.c.l.b16 %v362
    %v402 = vunpack.c.l.b16 %v363
    %v403 = vunpack.c.l.b16 %v364
    %v404 = vunpack.c.l.b16 %v365
    %v405 = vunpack.c.l.b16 %v366
    %v406 = vunpack.c.l.b16 %v367
    %v407 = vunpack.c.l.b16 %v368
    %v408 = vunpack.c.l.b16 %v369
    %v409 = vunpack.c.l.b16 %v370
    %v410 = vunpack.c.l.b16 %v371
    %v411 = vunpack.c.l.b16 %v372
    %v412 = vpack.c.b16 %v397, %v396
    %v413 = vpack.c.b16 %v399, %v398
    %v414 = vpack.c.b16 %v401, %v400
    %v415 = vpack.c.b16 %v403, %v402
    %v416 = vpack.c.b16 %v405, %v404
    %v417 = vpack.c.b16 %v407, %v406
    %v418 = vpack.c.b16 %v409, %v408
    %v419 = vpack.c.b16 %v411, %v410
    %428 = vmatprep.subr.bf16.mxu0 0
    %429 = vmatpush1.bf16.msra.mxu0 %v419
    %430 = vmatprep.subr.bf16.mxu0 0
    %431 = vmatpush1.bf16.msra.mxu0 %v418
    %432 = vmatprep.subr.bf16.mxu0 0
    %433 = vmatpush1.bf16.msra.mxu0 %v417
    %434 = vmatprep.subr.bf16.mxu0 0
    %435 = vmatpush1.bf16.msra.mxu0 %v416
    %436 = vmatprep.subr.bf16.mxu0 0
    %437 = vmatpush1.bf16.msra.mxu0 %v415
    %438 = vmatprep.subr.bf16.mxu0 0
    %439 = vmatpush1.bf16.msra.mxu0 %v414
    %440 = vmatprep.subr.bf16.mxu0 0
    %441 = vmatpush1.bf16.msra.mxu0 %v413
    %442 = vmatprep.subr.bf16.mxu0 0
    %443 = vmatpush1.bf16.msra.mxu0 %v412
    %444 = vmatprep.subr.bf16.mxu0 0
    %445 = vmatpush2.bf16.msra.mxu0 0
    %446 = vmatprep.subr.bf16.mxu0 0
    %447 = vmatpush2.bf16.msra.mxu0 0
    %448 = vmatprep.subr.bf16.mxu0 0
    %449 = vmatpush2.bf16.msra.mxu0 0
    %450 = vmatprep.subr.bf16.mxu0 0
    %451 = vmatpush2.bf16.msra.mxu0 0
    %452 = vmatprep.subr.bf16.mxu0 0
    %453 = vmatpush2.bf16.msra.mxu0 0
    %454 = vmatprep.subr.bf16.mxu0 0
    %455 = vmatpush2.bf16.msra.mxu0 0
    %456 = vmatprep.subr.bf16.mxu0 0
    %457 = vmatpush2.bf16.msra.mxu0 0
    %458 = vmatprep.subr.bf16.mxu0 0
    %459 = vmatpush2.bf16.msra.mxu0 0
    %460 = vmatprep.mubr.bf16.mxu0 0
    %461 = vmatmul.mubr.bf16.gmra.mxu0 %v356
    %v462 = vpop.f32.mrf.mxu0
    %v463 = vadd.f32 %v378, %v462
    %v464 = vpop.f32.mrf.mxu0
    %v465 = vpop.f32.mrf.mxu0
    %v466 = vpop.f32.mrf.mxu0
    %467 = vdwg.mxu0
    %v468 = vmax.f32 %v463, 0.0
    %v469 = vpack.c.bf16 %v468, %v468
    %v470 = vld [vmem:[%s9] sm:$0xf]
    %v471 = vld [vmem:[%s9 + $0x4] sm:$0xf]
    %v472 = vld [vmem:[%s9 + $0x8] sm:$0xf]
    %v473 = vld [vmem:[%s9 + $0xc] sm:$0xf]
    %v474 = vld [vmem:[%s9 + $0x10] sm:$0xf]
    %v475 = vld [vmem:[%s9 + $0x14] sm:$0xf]
    %v476 = vld [vmem:[%s9 + $0x18] sm:$0xf]
    %v477 = vld [vmem:[%s9 + $0x1c] sm:$0xf]
    %v478 = vld [vmem:[%s9 + $0x20] sm:$0xf]
    %v479 = vld [vmem:[%s9 + $0x24] sm:$0xf]
    %v480 = vld [vmem:[%s9 + $0x28] sm:$0xf]
    %v481 = vld [vmem:[%s9 + $0x2c] sm:$0xf]
    %v482 = vld [vmem:[%s9 + $0x30] sm:$0xf]
    %v483 = vld [vmem:[%s9 + $0x34] sm:$0xf]
    %v484 = vld [vmem:[%s9 + $0x38] sm:$0xf]
    %v485 = vld [vmem:[%s9 + $0x3c] sm:$0xf]
    %v486 = vld [vmem:[%s10] sm:$0x1]
    %v488 = vlaneseq
    %v489 = vshrl.u32 %v488, 7
    %v490 = vsub.s32 0, %v489
    %v491 = vrot.slane %v486, %v490
    %v509 = vunpack.c.l.b16 %v470
    %v510 = vunpack.c.l.b16 %v471
    %v511 = vunpack.c.l.b16 %v472
    %v512 = vunpack.c.l.b16 %v473
    %v513 = vunpack.c.l.b16 %v474
    %v514 = vunpack.c.l.b16 %v475
    %v515 = vunpack.c.l.b16 %v476
    %v516 = vunpack.c.l.b16 %v477
    %v517 = vunpack.c.l.b16 %v478
    %v518 = vunpack.c.l.b16 %v479
    %v519 = vunpack.c.l.b16 %v480
    %v520 = vunpack.c.l.b16 %v481
    %v521 = vunpack.c.l.b16 %v482
    %v522 = vunpack.c.l.b16 %v483
    %v523 = vunpack.c.l.b16 %v484
    %v524 = vunpack.c.l.b16 %v485
    %v525 = vpack.c.b16 %v510, %v509
    %v526 = vpack.c.b16 %v512, %v511
    %v527 = vpack.c.b16 %v514, %v513
    %v528 = vpack.c.b16 %v516, %v515
    %v529 = vpack.c.b16 %v518, %v517
    %v530 = vpack.c.b16 %v520, %v519
    %v531 = vpack.c.b16 %v522, %v521
    %v532 = vpack.c.b16 %v524, %v523
    %541 = vmatprep.subr.bf16.mxu0 0
    %542 = vmatpush1.bf16.msra.mxu0 %v532
    %543 = vmatprep.subr.bf16.mxu0 0
    %544 = vmatpush1.bf16.msra.mxu0 %v531
    %545 = vmatprep.subr.bf16.mxu0 0
    %546 = vmatpush1.bf16.msra.mxu0 %v530
    %547 = vmatprep.subr.bf16.mxu0 0
    %548 = vmatpush1.bf16.msra.mxu0 %v529
    %549 = vmatprep.subr.bf16.mxu0 0
    %550 = vmatpush1.bf16.msra.mxu0 %v528
    %551 = vmatprep.subr.bf16.mxu0 0
    %552 = vmatpush1.bf16.msra.mxu0 %v527
    %553 = vmatprep.subr.bf16.mxu0 0
    %554 = vmatpush1.bf16.msra.mxu0 %v526
    %555 = vmatprep.subr.bf16.mxu0 0
    %556 = vmatpush1.bf16.msra.mxu0 %v525
    %557 = vmatprep.subr.bf16.mxu0 0
    %558 = vmatpush2.bf16.msra.mxu0 0
    %559 = vmatprep.subr.bf16.mxu0 0
    %560 = vmatpush2.bf16.msra.mxu0 0
    %561 = vmatprep.subr.bf16.mxu0 0
    %562 = vmatpush2.bf16.msra.mxu0 0
    %563 = vmatprep.subr.bf16.mxu0 0
    %564 = vmatpush2.bf16.msra.mxu0 0
    %565 = vmatprep.subr.bf16.mxu0 0
    %566 = vmatpush2.bf16.msra.mxu0 0
    %567 = vmatprep.subr.bf16.mxu0 0
    %568 = vmatpush2.bf16.msra.mxu0 0
    %569 = vmatprep.subr.bf16.mxu0 0
    %570 = vmatpush2.bf16.msra.mxu0 0
    %571 = vmatprep.subr.bf16.mxu0 0
    %572 = vmatpush2.bf16.msra.mxu0 0
    %573 = vmatprep.mubr.bf16.mxu0 0
    %574 = vmatmul.mubr.bf16.gmra.mxu0 %v469
    %v575 = vpop.f32.mrf.mxu0
    %v576 = vadd.f32 %v491, %v575
    %v577 = vpop.f32.mrf.mxu0
    %v578 = vpop.f32.mrf.mxu0
    %v579 = vpop.f32.mrf.mxu0
    %580 = vdwg.mxu0
    %vm581 = vcmask 64512
    %582 = vst.msk [vmem:[#allocation13] sm:$0xff] %vm581, %v576
    // Predicated region
    $region70: #{tpu_custom_call.1} parent=1 // pred_check
      _
    $region71: #{tpu_custom_call.1} parent=1 // pred_check_branch
      %584 = sbr.rel (0) target = $region73
    $region72: #{tpu_custom_call.1} parent=1 // pred_region
      %s586 = ssub.s32 128, 128
      %587 = vsyncadd [#allocation4], %s586
      %s589 = sshll.u32 [#allocation13], 4
      %s590 = int_to_ptr.vmem [resolvable:$true] %s589
      %592 = dma.vmem_to_hbm [thread:$0]  %s590, 128, %s11, [#allocation4]
    $region73: #{tpu_custom_call.1} parent=1 // pred_fallthru
      _
    // Predicated region
    $region74: #{tpu_custom_call.1} parent=1 // pred_check
      _
    $region75: #{tpu_custom_call.1} parent=1 // pred_check_branch
      %594 = sbr.rel (0) target = $region77
    $region76: #{tpu_custom_call.1} parent=1 // pred_region
      %595 = dma.done [#allocation4], 128
    $region77: #{tpu_custom_call.1} parent=1 // pred_fallthru
      _
    %596 = vsyncpa [#allocation3], 1
    %597 = vsyncpa [#allocation6], 1
    %598 = vsyncpa [#allocation9], 1
    %599 = vsyncpa [#allocation12], 1
    %600 = vsyncpa [#allocation4], 1

</llo_original>
